<compile_context>
chip_gen: v6e
topology: v6e:2x2x1
jax: 0.10.0
libtpu: 0.0.40
codegen_flags: <defaults>
</compile_context>

<pallas_src>
import functools
import math

import jax
import jax.numpy as jnp
from jax import lax
from jax.experimental import pallas as pl
from jax.experimental.pallas import tpu as pltpu


def _round_up(x, m):
  return ((x + m - 1) // m) * m


def _embedding_word_kernel(
    ids_ref,       # SMEM (N_pad,) int32    scalar-prefetched flattened token ids
    table_ref,     # VMEM (V, E_pad)        word-vector table (compute dtype)
    wproj_ref,     # VMEM (E_pad, H_pad)    projection weight (no bias)
    w1_ref,        # VMEM (H_pad, 2*H_pad)  highway 1: [gate | transform]
    b1_ref,        # VMEM (1, 2*H_pad)      f32
    w2_ref,        # VMEM (H_pad, 2*H_pad)  highway 2: [gate | transform]
    b2_ref,        # VMEM (1, 2*H_pad)      f32
    out_ref,       # VMEM (TN, H_pad)       output tile
    emb_scr,       # VMEM (TN, E_pad)       gathered embeddings scratch
    *, TN, H_pad):
  base = pl.program_id(0) * TN

  # ---- embedding lookup: TN dynamic row copies, 8 independent copies per
  #      loop iteration so the scheduler can pipeline them -------------------
  UNROLL = 8  # TN is always a multiple of 8

  def gather8(blk, carry):
    t0 = blk * UNROLL
    for u in range(UNROLL):                      # static (trace-time) unroll
      t = t0 + u
      tok = ids_ref[base + t]
      emb_scr[pl.ds(t, 1), :] = table_ref[pl.ds(tok, 1), :]
    return carry

  lax.fori_loop(0, TN // UNROLL, gather8, 0)

  # ---- dropout (inference mode) is the identity -----------------------------
  # ---- projection: one MXU matmul over the whole token tile -----------------
  x = jnp.dot(emb_scr[...], wproj_ref[...],
              preferred_element_type=jnp.float32)            # (TN, H_pad) f32

  # ---- 2-layer highway; gate+transform fused, split on a 128-lane boundary --
  def highway(x, w_ref, b_ref):
    z = jnp.dot(x.astype(w_ref.dtype), w_ref[...],
                preferred_element_type=jnp.float32) + b_ref[...]
    g = jax.nn.sigmoid(z[:, :H_pad])             # gate      lanes [0, H_pad)
    t = jnp.maximum(z[:, H_pad:], 0.0)           # transform lanes [H_pad, 2*H_pad)
    return g * t + (1.0 - g) * x                 # blend kept in f32 (v5e-safe)

  x = highway(x, w1_ref, b1_ref)
  x = highway(x, w2_ref, b2_ref)

  out_ref[...] = x.astype(out_ref.dtype)


def embedding_word_forward(x_ids, params, *, tile_tokens=256,
                           compute_dtype=jnp.bfloat16,
                           out_dtype=jnp.float32):
  """Pallas implementation of EmbeddingWord.forward (inference mode).

  x_ids:  (B, L) int token ids.
  params: PyTorch-shaped parameters (see init_params).
  Returns (B, L, H) array of `out_dtype`.
  """
  B, L = x_ids.shape
  V, E = params["word_vectors"].shape
  H = params["proj_w"].shape[0]

  E_pad = _round_up(E, 128)       # lane-dense contraction dim
  H_pad = _round_up(H, 128)       # lane-dense feature dim (unmasked stores)

  N = B * L
  tile_tokens = max(8, _round_up(tile_tokens, 8))
  TN = tile_tokens if N >= tile_tokens else _round_up(N, 8)
  num_tiles = -(-N // TN)
  N_pad = num_tiles * TN

  # Clamp ids (OOB ids would silently read adjacent VMEM) and pad with 0.
  ids = jnp.clip(x_ids.reshape(-1).astype(jnp.int32), 0, V - 1)
  ids = jnp.pad(ids, (0, N_pad - N))

  cdt = compute_dtype

  def pad2(a, r, c):
    return jnp.pad(a, ((0, r - a.shape[0]), (0, c - a.shape[1])))

  # Repack PyTorch-shaped parameters: transpose, zero-pad to lane multiples,
  # fuse gate/transform side by side so the split is at lane H_pad.
  table = pad2(params["word_vectors"].astype(jnp.float32), V, E_pad).astype(cdt)
  wproj = pad2(params["proj_w"].T.astype(jnp.float32), E_pad, H_pad).astype(cdt)

  def fuse(gw, gb, tw, tb):
    w = jnp.concatenate([pad2(gw.T.astype(jnp.float32), H_pad, H_pad),
                         pad2(tw.T.astype(jnp.float32), H_pad, H_pad)], axis=1)
    b = jnp.concatenate([jnp.pad(gb.astype(jnp.float32), (0, H_pad - H)),
                         jnp.pad(tb.astype(jnp.float32), (0, H_pad - H))])[None, :]
    return w.astype(cdt), b

  w1, b1 = fuse(params["gate_w1"], params["gate_b1"],
                params["trans_w1"], params["trans_b1"])
  w2, b2 = fuse(params["gate_w2"], params["gate_b2"],
                params["trans_w2"], params["trans_b2"])

  # Grid-invariant operands: full block, constant index_map, single buffer.
  def invariant_spec(shape):
    nd = len(shape)
    return pl.BlockSpec(shape, lambda i, ids_ref, nd=nd: (0,) * nd,
                        pipeline_mode=pl.Buffered(buffer_count=1))

  kernel = functools.partial(_embedding_word_kernel, TN=TN, H_pad=H_pad)

  grid_spec = pltpu.PrefetchScalarGridSpec(
      num_scalar_prefetch=1,
      grid=(num_tiles,),
      in_specs=[
          invariant_spec(table.shape),
          invariant_spec(wproj.shape),
          invariant_spec(w1.shape), invariant_spec(b1.shape),
          invariant_spec(w2.shape), invariant_spec(b2.shape),
      ],
      out_specs=pl.BlockSpec((TN, H_pad), lambda i, ids_ref: (i, 0)),
      scratch_shapes=[pltpu.VMEM((TN, E_pad), cdt)],
  )

  # ---- explicit VMEM budget + cost estimate ---------------------------------
  def nbytes(a):
    return a.size * a.dtype.itemsize

  out_itemsize = jnp.dtype(out_dtype).itemsize
  weight_bytes = sum(nbytes(a) for a in (table, wproj, w1, b1, w2, b2))
  work_bytes = (TN * E_pad * jnp.dtype(cdt).itemsize       # emb scratch
                + 2 * TN * H_pad * out_itemsize)           # double-buffered out
  # NOTE: v7x physical VMEM is 64 MiB; huge vocabularies need the HBM-table
  # DMA path (see TODO at top) rather than a larger limit.
  vmem_limit = max(32 << 20,
                   min(int(1.25 * weight_bytes) + work_bytes + (4 << 20),
                       100 << 20))

  flops = 2 * N_pad * (E_pad * H_pad + 4 * H_pad * H_pad)
  cost = pl.CostEstimate(
      flops=int(flops),
      transcendentals=int(2 * N_pad * H_pad),
      bytes_accessed=int(ids.size * 4 + weight_bytes + N_pad * H_pad * out_itemsize),
  )

  out = pl.pallas_call(
      kernel,
      grid_spec=grid_spec,
      out_shape=jax.ShapeDtypeStruct((N_pad, H_pad), out_dtype),
      compiler_params=pltpu.CompilerParams(
          dimension_semantics=("parallel",),
          vmem_limit_bytes=int(vmem_limit)),
      cost_estimate=cost,
  )(ids, table, wproj, w1, b1, w2, b2)

  return out[:N, :H].reshape(B, L, H)


# ---------------------------- pure-JAX reference -----------------------------
def embedding_word_ref(x_ids, params):
  hp = jax.lax.Precision.HIGHEST
  emb = jnp.take(params["word_vectors"], x_ids, axis=0)                 # (B, L, E)
  h = jnp.matmul(emb, params["proj_w"].T, precision=hp)                 # (B, L, H)
  for k in (1, 2):
    g = jax.nn.sigmoid(
        jnp.matmul(h, params[f"gate_w{k}"].T, precision=hp) + params[f"gate_b{k}"])
    t = jax.nn.relu(
        jnp.matmul(h, params[f"trans_w{k}"].T, precision=hp) + params[f"trans_b{k}"])
    h = g * t + (1.0 - g) * h
  return h


def init_params(key, V, E, H):
  """Deterministic synthetic parameters with PyTorch module shapes."""
  ks = jax.random.split(key, 10)

  def u(k, shape, scale):
    return jax.random.uniform(k, shape, jnp.float32, -1.0, 1.0) * scale

  se, sh = 1.0 / math.sqrt(E), 1.0 / math.sqrt(H)
  return dict(
      word_vectors=jax.random.normal(ks[0], (V, E), jnp.float32),
      proj_w=u(ks[1], (H, E), se),                         # Linear(E, H, bias=False)
      gate_w1=u(ks[2], (H, H), sh), gate_b1=u(ks[3], (H,), sh),
      trans_w1=u(ks[4], (H, H), sh), trans_b1=u(ks[5], (H,), sh),
      gate_w2=u(ks[6], (H, H), sh), gate_b2=u(ks[7], (H,), sh),
      trans_w2=u(ks[8], (H, H), sh), trans_b2=u(ks[9], (H,), sh),
  )


if __name__ == "__main__":
  import numpy as np

  B, L, V, E, H = 2, 8, 100, 64, 32
  key = jax.random.PRNGKey(0)
  kp, kx = jax.random.split(key)

  params = init_params(kp, V, E, H)
  x_ids = jax.random.randint(kx, (B, L), 0, V, dtype=jnp.int32)

  ref = embedding_word_ref(x_ids, params)

  # Exact-math path (f32 operands): tight check against HIGHEST-precision ref.
  out_f32 = embedding_word_forward(x_ids, params, compute_dtype=jnp.float32)
  jax.block_until_ready(out_f32)
  assert out_f32.shape == (B, L, H)
  np.testing.assert_allclose(np.asarray(out_f32), np.asarray(ref),
                             atol=2e-3, rtol=2e-3)

  # Default fast path (bf16 operands on the MXU): looser tolerance.
  out = embedding_word_forward(x_ids, params)
  jax.block_until_ready(out)
  assert out.shape == (B, L, H)
  np.testing.assert_allclose(np.asarray(out), np.asarray(ref),
                             atol=5e-2, rtol=5e-2)

  print("KERNEL_OK")
</pallas_src>

<mosaic_0001>
module attributes {stable_mosaic.version = 11 : i64} {
  func.func @_embedding_word_kernel(%arg0: i32, %arg1: memref<16xi32, #tpu.memory_space<smem>>, %arg2: memref<100x128xf32, #tpu.memory_space<vmem>>, %arg3: memref<128x128xf32, #tpu.memory_space<vmem>>, %arg4: memref<128x256xf32, #tpu.memory_space<vmem>>, %arg5: memref<1x256xf32, #tpu.memory_space<vmem>>, %arg6: memref<128x256xf32, #tpu.memory_space<vmem>>, %arg7: memref<1x256xf32, #tpu.memory_space<vmem>>, %arg8: memref<16x128xf32, #tpu.memory_space<vmem>>, %arg9: memref<16x128xf32, #tpu.memory_space<vmem>>) attributes {dimension_semantics = [#tpu.dimension_semantics<parallel>], iteration_bounds = array<i64: 1>, scalar_prefetch = 1 : i64, scratch_operands = 1 : i64, tpu.core_type = #tpu.core_type<tc>, window_params = [{pipeline_mode = #tpu.pipeline_mode<synchronous>, transform_indices = @transform_0, window_bounds = array<i64: 100, 128>}, {pipeline_mode = #tpu.pipeline_mode<synchronous>, transform_indices = @transform_1, window_bounds = array<i64: 128, 128>}, {pipeline_mode = #tpu.pipeline_mode<synchronous>, transform_indices = @transform_2, window_bounds = array<i64: 128, 256>}, {pipeline_mode = #tpu.pipeline_mode<synchronous>, transform_indices = @transform_3, window_bounds = array<i64: 1, 256>}, {pipeline_mode = #tpu.pipeline_mode<synchronous>, transform_indices = @transform_4, window_bounds = array<i64: 128, 256>}, {pipeline_mode = #tpu.pipeline_mode<synchronous>, transform_indices = @transform_5, window_bounds = array<i64: 1, 256>}, {transform_indices = @transform_6, window_bounds = array<i64: 16, 128>}]} {
    %c16_i32 = arith.constant 16 : i32
    %0 = arith.muli %arg0, %c16_i32 : i32
    %c0_i32 = arith.constant 0 : i32
    %c2_i32 = arith.constant 2 : i32
    %1 = arith.addi %c0_i32, %c2_i32 : i32
    %c1_i32 = arith.constant 1 : i32
    scf.for %arg10 = %c0_i32 to %1 step %c1_i32  : i32 {
      %c8_i32 = arith.constant 8 : i32
      %44 = arith.muli %arg10, %c8_i32 : i32
      %c0_i32_22 = arith.constant 0 : i32
      %45 = arith.addi %44, %c0_i32_22 : i32
      %46 = arith.addi %0, %45 : i32
      %47 = arith.index_cast %46 : i32 to index
      %48 = memref.load %arg1[%47] : memref<16xi32, #tpu.memory_space<smem>>
      %49 = arith.index_cast %48 : i32 to index
      %c0_23 = arith.constant 0 : index
      %50 = vector.load %arg2[%49, %c0_23] : memref<100x128xf32, #tpu.memory_space<vmem>>, vector<1x128xf32>
      %51 = arith.index_cast %45 : i32 to index
      %c0_24 = arith.constant 0 : index
      %52 = vector.load %arg9[%51, %c0_24] : memref<16x128xf32, #tpu.memory_space<vmem>>, vector<1x128xf32>
      tpu.vector_store %arg9[%51, %c0_24], %50 {strides = array<i32>} : memref<16x128xf32, #tpu.memory_space<vmem>>, vector<1x128xf32>,
      %c1_i32_25 = arith.constant 1 : i32
      %53 = arith.addi %44, %c1_i32_25 : i32
      %54 = arith.addi %0, %53 : i32
      %55 = arith.index_cast %54 : i32 to index
      %56 = memref.load %arg1[%55] : memref<16xi32, #tpu.memory_space<smem>>
      %57 = arith.index_cast %56 : i32 to index
      %c0_26 = arith.constant 0 : index
      %58 = vector.load %arg2[%57, %c0_26] : memref<100x128xf32, #tpu.memory_space<vmem>>, vector<1x128xf32>
      %59 = arith.index_cast %53 : i32 to index
      %c0_27 = arith.constant 0 : index
      %60 = vector.load %arg9[%59, %c0_27] : memref<16x128xf32, #tpu.memory_space<vmem>>, vector<1x128xf32>
      tpu.vector_store %arg9[%59, %c0_27], %58 {strides = array<i32>} : memref<16x128xf32, #tpu.memory_space<vmem>>, vector<1x128xf32>,
      %c2_i32_28 = arith.constant 2 : i32
      %61 = arith.addi %44, %c2_i32_28 : i32
      %62 = arith.addi %0, %61 : i32
      %63 = arith.index_cast %62 : i32 to index
      %64 = memref.load %arg1[%63] : memref<16xi32, #tpu.memory_space<smem>>
      %65 = arith.index_cast %64 : i32 to index
      %c0_29 = arith.constant 0 : index
      %66 = vector.load %arg2[%65, %c0_29] : memref<100x128xf32, #tpu.memory_space<vmem>>, vector<1x128xf32>
      %67 = arith.index_cast %61 : i32 to index
      %c0_30 = arith.constant 0 : index
      %68 = vector.load %arg9[%67, %c0_30] : memref<16x128xf32, #tpu.memory_space<vmem>>, vector<1x128xf32>
      tpu.vector_store %arg9[%67, %c0_30], %66 {strides = array<i32>} : memref<16x128xf32, #tpu.memory_space<vmem>>, vector<1x128xf32>,
      %c3_i32 = arith.constant 3 : i32
      %69 = arith.addi %44, %c3_i32 : i32
      %70 = arith.addi %0, %69 : i32
      %71 = arith.index_cast %70 : i32 to index
      %72 = memref.load %arg1[%71] : memref<16xi32, #tpu.memory_space<smem>>
      %73 = arith.index_cast %72 : i32 to index
      %c0_31 = arith.constant 0 : index
      %74 = vector.load %arg2[%73, %c0_31] : memref<100x128xf32, #tpu.memory_space<vmem>>, vector<1x128xf32>
      %75 = arith.index_cast %69 : i32 to index
      %c0_32 = arith.constant 0 : index
      %76 = vector.load %arg9[%75, %c0_32] : memref<16x128xf32, #tpu.memory_space<vmem>>, vector<1x128xf32>
      tpu.vector_store %arg9[%75, %c0_32], %74 {strides = array<i32>} : memref<16x128xf32, #tpu.memory_space<vmem>>, vector<1x128xf32>,
      %c4_i32 = arith.constant 4 : i32
      %77 = arith.addi %44, %c4_i32 : i32
      %78 = arith.addi %0, %77 : i32
      %79 = arith.index_cast %78 : i32 to index
      %80 = memref.load %arg1[%79] : memref<16xi32, #tpu.memory_space<smem>>
      %81 = arith.index_cast %80 : i32 to index
      %c0_33 = arith.constant 0 : index
      %82 = vector.load %arg2[%81, %c0_33] : memref<100x128xf32, #tpu.memory_space<vmem>>, vector<1x128xf32>
      %83 = arith.index_cast %77 : i32 to index
      %c0_34 = arith.constant 0 : index
      %84 = vector.load %arg9[%83, %c0_34] : memref<16x128xf32, #tpu.memory_space<vmem>>, vector<1x128xf32>
      tpu.vector_store %arg9[%83, %c0_34], %82 {strides = array<i32>} : memref<16x128xf32, #tpu.memory_space<vmem>>, vector<1x128xf32>,
      %c5_i32 = arith.constant 5 : i32
      %85 = arith.addi %44, %c5_i32 : i32
      %86 = arith.addi %0, %85 : i32
      %87 = arith.index_cast %86 : i32 to index
      %88 = memref.load %arg1[%87] : memref<16xi32, #tpu.memory_space<smem>>
      %89 = arith.index_cast %88 : i32 to index
      %c0_35 = arith.constant 0 : index
      %90 = vector.load %arg2[%89, %c0_35] : memref<100x128xf32, #tpu.memory_space<vmem>>, vector<1x128xf32>
      %91 = arith.index_cast %85 : i32 to index
      %c0_36 = arith.constant 0 : index
      %92 = vector.load %arg9[%91, %c0_36] : memref<16x128xf32, #tpu.memory_space<vmem>>, vector<1x128xf32>
      tpu.vector_store %arg9[%91, %c0_36], %90 {strides = array<i32>} : memref<16x128xf32, #tpu.memory_space<vmem>>, vector<1x128xf32>,
      %c6_i32 = arith.constant 6 : i32
      %93 = arith.addi %44, %c6_i32 : i32
      %94 = arith.addi %0, %93 : i32
      %95 = arith.index_cast %94 : i32 to index
      %96 = memref.load %arg1[%95] : memref<16xi32, #tpu.memory_space<smem>>
      %97 = arith.index_cast %96 : i32 to index
      %c0_37 = arith.constant 0 : index
      %98 = vector.load %arg2[%97, %c0_37] : memref<100x128xf32, #tpu.memory_space<vmem>>, vector<1x128xf32>
      %99 = arith.index_cast %93 : i32 to index
      %c0_38 = arith.constant 0 : index
      %100 = vector.load %arg9[%99, %c0_38] : memref<16x128xf32, #tpu.memory_space<vmem>>, vector<1x128xf32>
      tpu.vector_store %arg9[%99, %c0_38], %98 {strides = array<i32>} : memref<16x128xf32, #tpu.memory_space<vmem>>, vector<1x128xf32>,
      %c7_i32 = arith.constant 7 : i32
      %101 = arith.addi %44, %c7_i32 : i32
      %102 = arith.addi %0, %101 : i32
      %103 = arith.index_cast %102 : i32 to index
      %104 = memref.load %arg1[%103] : memref<16xi32, #tpu.memory_space<smem>>
      %105 = arith.index_cast %104 : i32 to index
      %c0_39 = arith.constant 0 : index
      %106 = vector.load %arg2[%105, %c0_39] : memref<100x128xf32, #tpu.memory_space<vmem>>, vector<1x128xf32>
      %107 = arith.index_cast %101 : i32 to index
      %c0_40 = arith.constant 0 : index
      %108 = vector.load %arg9[%107, %c0_40] : memref<16x128xf32, #tpu.memory_space<vmem>>, vector<1x128xf32>
      tpu.vector_store %arg9[%107, %c0_40], %106 {strides = array<i32>} : memref<16x128xf32, #tpu.memory_space<vmem>>, vector<1x128xf32>,
    }
    %c2_i32_0 = arith.constant 2 : i32
    %c0 = arith.constant 0 : index
    %c0_1 = arith.constant 0 : index
    %2 = vector.load %arg9[%c0, %c0_1] : memref<16x128xf32, #tpu.memory_space<vmem>>, vector<16x128xf32>
    %c0_2 = arith.constant 0 : index
    %c0_3 = arith.constant 0 : index
    %3 = vector.load %arg3[%c0_2, %c0_3] : memref<128x128xf32, #tpu.memory_space<vmem>>, vector<128x128xf32>
    %cst = arith.constant dense<0.000000e+00> : vector<16x128xf32>
    %4 = tpu.matmul %2, %3, %cst {dimension_numbers = #tpu.dot_dimension_numbers<[1], [0], [0], [1], [0, 0, 1, 1], [], []>} : vector<16x128xf32>, vector<128x128xf32>, vector<16x128xf32> -> vector<16x128xf32>
    %c0_4 = arith.constant 0 : index
    %c0_5 = arith.constant 0 : index
    %5 = vector.load %arg4[%c0_4, %c0_5] : memref<128x256xf32, #tpu.memory_space<vmem>>, vector<128x256xf32>
    %cst_6 = arith.constant dense<0.000000e+00> : vector<16x256xf32>
    %6 = tpu.matmul %4, %5, %cst_6 {dimension_numbers = #tpu.dot_dimension_numbers<[1], [0], [0], [1], [0, 0, 1, 1], [], []>} : vector<16x128xf32>, vector<128x256xf32>, vector<16x256xf32> -> vector<16x256xf32>
    %c0_7 = arith.constant 0 : index
    %c0_8 = arith.constant 0 : index
    %7 = vector.load %arg5[%c0_7, %c0_8] : memref<1x256xf32, #tpu.memory_space<vmem>>, vector<1x256xf32>
    %8 = vector.broadcast %7 : vector<1x256xf32> to vector<16x256xf32>
    %9 = arith.addf %6, %8 : vector<16x256xf32>
    %10 = vector.extract_strided_slice %9 {offsets = [0, 0], sizes = [16, 128], strides = [1, 1]} : vector<16x256xf32> to vector<16x128xf32>
    %11 = arith.negf %10 : vector<16x128xf32>
    %12 = math.exp %11 : vector<16x128xf32>
    %cst_9 = arith.constant 1.000000e+00 : f32
    %13 = vector.broadcast %cst_9 : f32 to vector<16x128xf32>
    %14 = arith.addf %13, %12 : vector<16x128xf32>
    %15 = arith.divf %13, %14 : vector<16x128xf32>
    %16 = vector.extract_strided_slice %9 {offsets = [0, 128], sizes = [16, 128], strides = [1, 1]} : vector<16x256xf32> to vector<16x128xf32>
    %cst_10 = arith.constant 0.000000e+00 : f32
    %17 = vector.broadcast %cst_10 : f32 to vector<16x128xf32>
    %18 = arith.maximumf %16, %17 : vector<16x128xf32>
    %19 = arith.mulf %15, %18 : vector<16x128xf32>
    %cst_11 = arith.constant 1.000000e+00 : f32
    %20 = vector.broadcast %cst_11 : f32 to vector<16x128xf32>
    %21 = arith.subf %20, %15 : vector<16x128xf32>
    %22 = arith.mulf %21, %4 : vector<16x128xf32>
    %23 = arith.addf %19, %22 : vector<16x128xf32>
    %c0_12 = arith.constant 0 : index
    %c0_13 = arith.constant 0 : index
    %24 = vector.load %arg6[%c0_12, %c0_13] : memref<128x256xf32, #tpu.memory_space<vmem>>, vector<128x256xf32>
    %cst_14 = arith.constant dense<0.000000e+00> : vector<16x256xf32>
    %25 = tpu.matmul %23, %24, %cst_14 {dimension_numbers = #tpu.dot_dimension_numbers<[1], [0], [0], [1], [0, 0, 1, 1], [], []>} : vector<16x128xf32>, vector<128x256xf32>, vector<16x256xf32> -> vector<16x256xf32>
    %c0_15 = arith.constant 0 : index
    %c0_16 = arith.constant 0 : index
    %26 = vector.load %arg7[%c0_15, %c0_16] : memref<1x256xf32, #tpu.memory_space<vmem>>, vector<1x256xf32>
    %27 = vector.broadcast %26 : vector<1x256xf32> to vector<16x256xf32>
    %28 = arith.addf %25, %27 : vector<16x256xf32>
    %29 = vector.extract_strided_slice %28 {offsets = [0, 0], sizes = [16, 128], strides = [1, 1]} : vector<16x256xf32> to vector<16x128xf32>
    %30 = arith.negf %29 : vector<16x128xf32>
    %31 = math.exp %30 : vector<16x128xf32>
    %cst_17 = arith.constant 1.000000e+00 : f32
    %32 = vector.broadcast %cst_17 : f32 to vector<16x128xf32>
    %33 = arith.addf %32, %31 : vector<16x128xf32>
    %34 = arith.divf %32, %33 : vector<16x128xf32>
    %35 = vector.extract_strided_slice %28 {offsets = [0, 128], sizes = [16, 128], strides = [1, 1]} : vector<16x256xf32> to vector<16x128xf32>
    %cst_18 = arith.constant 0.000000e+00 : f32
    %36 = vector.broadcast %cst_18 : f32 to vector<16x128xf32>
    %37 = arith.maximumf %35, %36 : vector<16x128xf32>
    %38 = arith.mulf %34, %37 : vector<16x128xf32>
    %cst_19 = arith.constant 1.000000e+00 : f32
    %39 = vector.broadcast %cst_19 : f32 to vector<16x128xf32>
    %40 = arith.subf %39, %34 : vector<16x128xf32>
    %41 = arith.mulf %40, %23 : vector<16x128xf32>
    %42 = arith.addf %38, %41 : vector<16x128xf32>
    %c0_20 = arith.constant 0 : index
    %c0_21 = arith.constant 0 : index
    %43 = vector.load %arg8[%c0_20, %c0_21] : memref<16x128xf32, #tpu.memory_space<vmem>>, vector<16x128xf32>
    tpu.vector_store %arg8[%c0_20, %c0_21], %42 {strides = array<i32>} : memref<16x128xf32, #tpu.memory_space<vmem>>, vector<16x128xf32>,
    return
  }
  func.func @transform_0(%arg0: i32, %arg1: memref<16xi32, #tpu.memory_space<smem>>) -> (i32, i32) {
    %c0_i32 = arith.constant 0 : i32
    %c0_i32_0 = arith.constant 0 : i32
    %c0_i32_1 = arith.constant 0 : i32
    return %c0_i32, %c0_i32_0 : i32, i32
  }
  func.func @transform_1(%arg0: i32, %arg1: memref<16xi32, #tpu.memory_space<smem>>) -> (i32, i32) {
    %c0_i32 = arith.constant 0 : i32
    %c0_i32_0 = arith.constant 0 : i32
    %c0_i32_1 = arith.constant 0 : i32
    return %c0_i32, %c0_i32_0 : i32, i32
  }
  func.func @transform_2(%arg0: i32, %arg1: memref<16xi32, #tpu.memory_space<smem>>) -> (i32, i32) {
    %c0_i32 = arith.constant 0 : i32
    %c0_i32_0 = arith.constant 0 : i32
    %c0_i32_1 = arith.constant 0 : i32
    return %c0_i32, %c0_i32_0 : i32, i32
  }
  func.func @transform_3(%arg0: i32, %arg1: memref<16xi32, #tpu.memory_space<smem>>) -> (i32, i32) {
    %c0_i32 = arith.constant 0 : i32
    %c0_i32_0 = arith.constant 0 : i32
    %c0_i32_1 = arith.constant 0 : i32
    return %c0_i32, %c0_i32_0 : i32, i32
  }
  func.func @transform_4(%arg0: i32, %arg1: memref<16xi32, #tpu.memory_space<smem>>) -> (i32, i32) {
    %c0_i32 = arith.constant 0 : i32
    %c0_i32_0 = arith.constant 0 : i32
    %c0_i32_1 = arith.constant 0 : i32
    return %c0_i32, %c0_i32_0 : i32, i32
  }
  func.func @transform_5(%arg0: i32, %arg1: memref<16xi32, #tpu.memory_space<smem>>) -> (i32, i32) {
    %c0_i32 = arith.constant 0 : i32
    %c0_i32_0 = arith.constant 0 : i32
    %c0_i32_1 = arith.constant 0 : i32
    return %c0_i32, %c0_i32_0 : i32, i32
  }
  func.func @transform_6(%arg0: i32, %arg1: memref<16xi32, #tpu.memory_space<smem>>) -> (i32, i32) {
    %c0_i32 = arith.constant 0 : i32
    %c0_i32_0 = arith.constant 0 : i32
    return %arg0, %c0_i32 : i32, i32
  }
}

</mosaic_0001>

<llo_original>
// kernel: tpu_custom_call.1
$region0: #{tpu_custom_call.1}
  #allocation0 [shape = 'u32[]', space=smem, size = 0x4, offset = 0x4, fixed_abs, tag = 'smem constant byte address 0x4 - core index']
  #allocation1 [shape = 'u32[144,128]{1,0:T(1,128)}', space=vmem, size = 0x12000, scoped, tag = 'internal scratch']
  #allocation2 [shape = 'f32[16,128]{1,0:T(8,128)}', space=vmem, size = 0x2000, scoped, tag = 'scratch operand']
  #allocation3 [shape = 's32[1]{0}', space=sflag, size = 0x4, scoped, tag = 'scoped memory for tpu_custom_call.1']
  #allocation4 [shape = 'u8[512]{0}', space=smem, size = 0x200, scoped, tag = 'prefetched SMEM operand 0']
  %s0 = inlined_call_operand.hbm [shape: s32[16], index: 0, kind: input, shape index: {}]
  %s1 = inlined_call_operand.hbm [shape: f32[100,128], index: 1, kind: input, shape index: {}]
  %s2 = inlined_call_operand.hbm [shape: f32[128,128], index: 2, kind: input, shape index: {}]
  %s3 = inlined_call_operand.hbm [shape: f32[128,256], index: 3, kind: input, shape index: {}]
  %s4 = inlined_call_operand.vmem [shape: f32[1,256], index: 4, kind: input, shape index: {}]
  %s5 = inlined_call_operand.hbm [shape: f32[128,256], index: 5, kind: input, shape index: {}]
  %s6 = inlined_call_operand.vmem [shape: f32[1,256], index: 6, kind: input, shape index: {}]
  %s7 = inlined_call_operand.hbm [shape: f32[16,128], index: 7, kind: output, shape index: {}]
  %s8 = sld [smem:[#allocation0]]
  $region57: #{tpu_custom_call.1} parent=0
    _
  %s10 = ssub.s32 1, %s8
  %s11 = scalar_select 0, %s10, %s8
  %13 = dma.hbm_to_smem %s0, 16, [#allocation4], [#allocation3]
  %14 = dma.done [#allocation3], 16
  %15 = sfence
  $region1: #{tpu_custom_call.1} parent=0
    #allocation5 [shape = 'u8[53248]{0}', space=vmem, size = 0xd000, scoped, tag = 'input window, operand 1, single buffered']
    #allocation6 [shape = 's32[1]{0}', space=sflag, size = 0x4, scoped, tag = 'scoped memory for tpu_custom_call.1']
    #allocation7 [shape = 's32[1]{0}', space=sflag, size = 0x4, scoped, tag = 'scoped memory for tpu_custom_call.1']
    #allocation8 [shape = 'u8[65536]{0}', space=vmem, size = 0x10000, scoped, tag = 'input window, operand 2, single buffered']
    #allocation9 [shape = 's32[1]{0}', space=sflag, size = 0x4, scoped, tag = 'scoped memory for tpu_custom_call.1']
    #allocation10 [shape = 'u8[131072]{0}', space=vmem, size = 0x20000, scoped, tag = 'input window, operand 3, single buffered']
    #allocation11 [shape = 'u8[131072]{0}', space=vmem, size = 0x20000, scoped, tag = 'input window, operand 5, single buffered']
    #allocation12 [shape = 's32[1]{0}', space=sflag, size = 0x4, scoped, tag = 'scoped memory for tpu_custom_call.1']
    #allocation13 [shape = 'u8[8192]{0}', space=vmem, size = 0x2000, scoped, tag = 'output window, operand 0, single buffered']
    %16 = vsyncpa [#allocation6], 0
    %17 = vsyncpa [#allocation9], 0
    %18 = vsyncpa [#allocation12], 0
    %19 = vsyncpa [#allocation7], 0
    // Predicated region
    $region2: #{tpu_custom_call.1} parent=1 // pred_check
      _
    $region3: #{tpu_custom_call.1} parent=1 // pred_check_branch
      %21 = sbr.rel (0) target = $region5
    $region4: #{tpu_custom_call.1} parent=1 // pred_region
      %s23 = ssub.s32 1664, 1664
      %24 = vsyncadd [#allocation6], %s23
      %s25 = sshll.u32 [#allocation5], 4
      %s26 = int_to_ptr.vmem [resolvable:$true] %s25
      %31 = dma.hbm_to_vmem [thread:$0]  %s1, 1664, %s26, [#allocation6], 128, 128, 8
    $region5: #{tpu_custom_call.1} parent=1 // pred_fallthru
      _
    // Predicated region
    $region6: #{tpu_custom_call.1} parent=1 // pred_check
      _
    $region7: #{tpu_custom_call.1} parent=1 // pred_check_branch
      %33 = sbr.rel (0) target = $region9
    $region8: #{tpu_custom_call.1} parent=1 // pred_region
      %s35 = ssub.s32 2048, 2048
      %36 = vsyncadd [#allocation9], %s35
      %s37 = sshll.u32 [#allocation8], 4
      %s38 = int_to_ptr.vmem [resolvable:$true] %s37
      %43 = dma.hbm_to_vmem [thread:$0]  %s2, 2048, %s38, [#allocation9], 128, 128, 8
    $region9: #{tpu_custom_call.1} parent=1 // pred_fallthru
      _
    // Predicated region
    $region10: #{tpu_custom_call.1} parent=1 // pred_check
      _
    $region11: #{tpu_custom_call.1} parent=1 // pred_check_branch
      %45 = sbr.rel (0) target = $region13
    $region12: #{tpu_custom_call.1} parent=1 // pred_region
      %s47 = ssub.s32 4096, 4096
      %48 = vsyncadd [#allocation9], %s47
      %s49 = sshll.u32 [#allocation10], 4
      %s50 = int_to_ptr.vmem [resolvable:$true] %s49
      %55 = dma.hbm_to_vmem [thread:$0]  %s3, 4096, %s50, [#allocation9], 256, 256, 16
    $region13: #{tpu_custom_call.1} parent=1 // pred_fallthru
      _
    // Predicated region
    $region14: #{tpu_custom_call.1} parent=1 // pred_check
      _
    $region15: #{tpu_custom_call.1} parent=1 // pred_check_branch
      %57 = sbr.rel (0) target = $region17
    $region16: #{tpu_custom_call.1} parent=1 // pred_region
      _
    $region17: #{tpu_custom_call.1} parent=1 // pred_fallthru
      _
    // Predicated region
    $region18: #{tpu_custom_call.1} parent=1 // pred_check
      _
    $region19: #{tpu_custom_call.1} parent=1 // pred_check_branch
      %59 = sbr.rel (0) target = $region21
    $region20: #{tpu_custom_call.1} parent=1 // pred_region
      %s61 = ssub.s32 4096, 4096
      %62 = vsyncadd [#allocation12], %s61
      %s63 = sshll.u32 [#allocation11], 4
      %s64 = int_to_ptr.vmem [resolvable:$true] %s63
      %69 = dma.hbm_to_vmem [thread:$0]  %s5, 4096, %s64, [#allocation12], 256, 256, 16
    $region21: #{tpu_custom_call.1} parent=1 // pred_fallthru
      _
    // Predicated region
    $region22: #{tpu_custom_call.1} parent=1 // pred_check
      _
    $region23: #{tpu_custom_call.1} parent=1 // pred_check_branch
      %71 = sbr.rel (0) target = $region25
    $region24: #{tpu_custom_call.1} parent=1 // pred_region
      _
    $region25: #{tpu_custom_call.1} parent=1 // pred_fallthru
      _
    // Predicated region
    $region26: #{tpu_custom_call.1} parent=1 // pred_check
      _
    $region27: #{tpu_custom_call.1} parent=1 // pred_check_branch
      %73 = sbr.rel (0) target = $region29
    $region28: #{tpu_custom_call.1} parent=1 // pred_region
      %74 = dma.done [#allocation6], 1664
    $region29: #{tpu_custom_call.1} parent=1 // pred_fallthru
      _
    // Predicated region
    $region30: #{tpu_custom_call.1} parent=1 // pred_check
      _
    $region31: #{tpu_custom_call.1} parent=1 // pred_check_branch
      %76 = sbr.rel (0) target = $region33
    $region32: #{tpu_custom_call.1} parent=1 // pred_region
      %77 = dma.done [#allocation9], 2048
    $region33: #{tpu_custom_call.1} parent=1 // pred_fallthru
      _
    // Predicated region
    $region34: #{tpu_custom_call.1} parent=1 // pred_check
      _
    $region35: #{tpu_custom_call.1} parent=1 // pred_check_branch
      %79 = sbr.rel (0) target = $region37
    $region36: #{tpu_custom_call.1} parent=1 // pred_region
      %80 = dma.done [#allocation9], 4096
    $region37: #{tpu_custom_call.1} parent=1 // pred_fallthru
      _
    // Predicated region
    $region38: #{tpu_custom_call.1} parent=1 // pred_check
      _
    $region39: #{tpu_custom_call.1} parent=1 // pred_check_branch
      %82 = sbr.rel (0) target = $region41
    $region40: #{tpu_custom_call.1} parent=1 // pred_region
      %83 = dma.done [#allocation12], 4096
    $region41: #{tpu_custom_call.1} parent=1 // pred_fallthru
      _
    %s84 = smul.u32 0, 16
    loop: start=0, step=1, limit=2
    $region42: #{tpu_custom_call.1} parent=1 // loop_pre_header
      _
    $region43: #{tpu_custom_call.1} parent=1 // loop_header
      %s86 = sphi 0, %s90
      %p87 = scmp.ge.s32.totalorder %s86, 2
    $region44: #{tpu_custom_call.1} parent=1 // loop_header_branch
      %89 = sbr.rel (%p87) target = $region48
    $region45: #{tpu_custom_call.1} parent=1 // loop_body
      %s91 = smul.u32 %s86, 8
      %s92 = sadd.s32 %s84, %s91
      %s93 = sld [smem:[#allocation4 + %s92]]
      %s94 = scalar_lea.vmem [#allocation5], %s93
      %v95 = vld [vmem:[%s94] sm:$0x1]
      %s96 = scalar_lea.vmem [#allocation2], %s91
      %97 = vst [vmem:[%s96] sm:$0x1] %v95
      %s98 = sadd.s32 %s91, 1
      %s99 = sadd.s32 %s84, %s98
      %s100 = sld [smem:[#allocation4 + %s99]]
      %s101 = scalar_lea.vmem [#allocation5], %s100
      %v102 = vld [vmem:[%s101] sm:$0x1]
      %s103 = scalar_lea.vmem [#allocation2], %s98
      %104 = vst [vmem:[%s103] sm:$0x1] %v102
      %s105 = sadd.s32 %s91, 2
      %s106 = sadd.s32 %s84, %s105
      %s107 = sld [smem:[#allocation4 + %s106]]
      %s108 = scalar_lea.vmem [#allocation5], %s107
      %v109 = vld [vmem:[%s108] sm:$0x1]
      %s110 = scalar_lea.vmem [#allocation2], %s105
      %111 = vst [vmem:[%s110] sm:$0x1] %v109
      %s112 = sadd.s32 %s91, 3
      %s113 = sadd.s32 %s84, %s112
      %s114 = sld [smem:[#allocation4 + %s113]]
      %s115 = scalar_lea.vmem [#allocation5], %s114
      %v116 = vld [vmem:[%s115] sm:$0x1]
      %s117 = scalar_lea.vmem [#allocation2], %s112
      %118 = vst [vmem:[%s117] sm:$0x1] %v116
      %s119 = sadd.s32 %s91, 4
      %s120 = sadd.s32 %s84, %s119
      %s121 = sld [smem:[#allocation4 + %s120]]
      %s122 = scalar_lea.vmem [#allocation5], %s121
      %v123 = vld [vmem:[%s122] sm:$0x1]
      %s124 = scalar_lea.vmem [#allocation2], %s119
      %125 = vst [vmem:[%s124] sm:$0x1] %v123
      %s126 = sadd.s32 %s91, 5
      %s127 = sadd.s32 %s84, %s126
      %s128 = sld [smem:[#allocation4 + %s127]]
      %s129 = scalar_lea.vmem [#allocation5], %s128
      %v130 = vld [vmem:[%s129] sm:$0x1]
      %s131 = scalar_lea.vmem [#allocation2], %s126
      %132 = vst [vmem:[%s131] sm:$0x1] %v130
      %s133 = sadd.s32 %s91, 6
      %s134 = sadd.s32 %s84, %s133
      %s135 = sld [smem:[#allocation4 + %s134]]
      %s136 = scalar_lea.vmem [#allocation5], %s135
      %v137 = vld [vmem:[%s136] sm:$0x1]
      %s138 = scalar_lea.vmem [#allocation2], %s133
      %139 = vst [vmem:[%s138] sm:$0x1] %v137
      %s140 = sadd.s32 %s91, 7
      %s141 = sadd.s32 %s84, %s140
      %s142 = sld [smem:[#allocation4 + %s141]]
      %s143 = scalar_lea.vmem [#allocation5], %s142
      %v144 = vld [vmem:[%s143] sm:$0x1]
      %s145 = scalar_lea.vmem [#allocation2], %s140
      %146 = vst [vmem:[%s145] sm:$0x1] %v144
    $region46: #{tpu_custom_call.1} parent=1 // loop_footer
      %s90 = sadd.s32 1, %s86
    $region47: #{tpu_custom_call.1} parent=1 // loop_footer_branch
      %85 = sbr.rel target = $region43
    $region48: #{tpu_custom_call.1} parent=1 // loop_exit
      _
    %v147 = vld [vmem:[#allocation2] sm:$0xff]
    %v148 = vld [vmem:[#allocation2 + $0x8] sm:$0xff]
    %v149 = vld [vmem:[#allocation8] sm:$0xff]
    %v150 = vld [vmem:[#allocation8 + $0x8] sm:$0xff]
    %v151 = vld [vmem:[#allocation8 + $0x10] sm:$0xff]
    %v152 = vld [vmem:[#allocation8 + $0x18] sm:$0xff]
    %v153 = vld [vmem:[#allocation8 + $0x20] sm:$0xff]
    %v154 = vld [vmem:[#allocation8 + $0x28] sm:$0xff]
    %v155 = vld [vmem:[#allocation8 + $0x30] sm:$0xff]
    %v156 = vld [vmem:[#allocation8 + $0x38] sm:$0xff]
    %v157 = vld [vmem:[#allocation8 + $0x40] sm:$0xff]
    %v158 = vld [vmem:[#allocation8 + $0x48] sm:$0xff]
    %v159 = vld [vmem:[#allocation8 + $0x50] sm:$0xff]
    %v160 = vld [vmem:[#allocation8 + $0x58] sm:$0xff]
    %v161 = vld [vmem:[#allocation8 + $0x60] sm:$0xff]
    %v162 = vld [vmem:[#allocation8 + $0x68] sm:$0xff]
    %v163 = vld [vmem:[#allocation8 + $0x70] sm:$0xff]
    %v164 = vld [vmem:[#allocation8 + $0x78] sm:$0xff]
    %165 = vmatprep.subr.mxu0 0.0
    %166 = vmatpush1.msra.mxu0 %v164
    %167 = vmatprep.subr.mxu0 0.0
    %168 = vmatpush1.msra.mxu0 %v163
    %169 = vmatprep.subr.mxu0 0.0
    %170 = vmatpush1.msra.mxu0 %v162
    %171 = vmatprep.subr.mxu0 0.0
    %172 = vmatpush1.msra.mxu0 %v161
    %173 = vmatprep.subr.mxu0 0.0
    %174 = vmatpush1.msra.mxu0 %v160
    %175 = vmatprep.subr.mxu0 0.0
    %176 = vmatpush1.msra.mxu0 %v159
    %177 = vmatprep.subr.mxu0 0.0
    %178 = vmatpush1.msra.mxu0 %v158
    %179 = vmatprep.subr.mxu0 0.0
    %180 = vmatpush1.msra.mxu0 %v157
    %181 = vmatprep.subr.mxu0 0.0
    %182 = vmatpush1.msra.mxu0 %v156
    %183 = vmatprep.subr.mxu0 0.0
    %184 = vmatpush1.msra.mxu0 %v155
    %185 = vmatprep.subr.mxu0 0.0
    %186 = vmatpush1.msra.mxu0 %v154
    %187 = vmatprep.subr.mxu0 0.0
    %188 = vmatpush1.msra.mxu0 %v153
    %189 = vmatprep.subr.mxu0 0.0
    %190 = vmatpush1.msra.mxu0 %v152
    %191 = vmatprep.subr.mxu0 0.0
    %192 = vmatpush1.msra.mxu0 %v151
    %193 = vmatprep.subr.mxu0 0.0
    %194 = vmatpush1.msra.mxu0 %v150
    %195 = vmatprep.subr.mxu0 0.0
    %196 = vmatpush1.msra.mxu0 %v149
    %197 = vmatprep.subr.mxu0 0.0
    %198 = vmatpush2.msra.mxu0 0.0
    %199 = vmatprep.subr.mxu0 0.0
    %200 = vmatpush2.msra.mxu0 0.0
    %201 = vmatprep.subr.mxu0 0.0
    %202 = vmatpush2.msra.mxu0 0.0
    %203 = vmatprep.subr.mxu0 0.0
    %204 = vmatpush2.msra.mxu0 0.0
    %205 = vmatprep.subr.mxu0 0.0
    %206 = vmatpush2.msra.mxu0 0.0
    %207 = vmatprep.subr.mxu0 0.0
    %208 = vmatpush2.msra.mxu0 0.0
    %209 = vmatprep.subr.mxu0 0.0
    %210 = vmatpush2.msra.mxu0 0.0
    %211 = vmatprep.subr.mxu0 0.0
    %212 = vmatpush2.msra.mxu0 0.0
    %213 = vmatprep.subr.mxu0 0.0
    %214 = vmatpush2.msra.mxu0 0.0
    %215 = vmatprep.subr.mxu0 0.0
    %216 = vmatpush2.msra.mxu0 0.0
    %217 = vmatprep.subr.mxu0 0.0
    %218 = vmatpush2.msra.mxu0 0.0
    %219 = vmatprep.subr.mxu0 0.0
    %220 = vmatpush2.msra.mxu0 0.0
    %221 = vmatprep.subr.mxu0 0.0
    %222 = vmatpush2.msra.mxu0 0.0
    %223 = vmatprep.subr.mxu0 0.0
    %224 = vmatpush2.msra.mxu0 0.0
    %225 = vmatprep.subr.mxu0 0.0
    %226 = vmatpush2.msra.mxu0 0.0
    %227 = vmatprep.subr.mxu0 0.0
    %228 = vmatpush2.msra.mxu0 0.0
    %229 = vmatprep.mubr.f32.mxu0 0.0
    %230 = vmatmul.mubr.f32.gmra.mxu0 %v147
    %v231 = vpop.f32.mrf.mxu0
    %v232 = vadd.f32 0.0, %v231
    %v233 = vpop.f32.mrf.mxu0
    %234 = vmatprep.mubr.f32.mxu0 0.0
    %235 = vmatmul.mubr.f32.gmra.mxu0 %v148
    %v236 = vpop.f32.mrf.mxu0
    %v237 = vadd.f32 0.0, %v236
    %v238 = vpop.f32.mrf.mxu0
    %239 = vdwg.mxu0
    %v240 = vld [vmem:[#allocation10] sm:$0xff]
    %v241 = vld [vmem:[#allocation10 + $0x8] sm:$0xff]
    %v242 = vld [vmem:[#allocation10 + $0x10] sm:$0xff]
    %v243 = vld [vmem:[#allocation10 + $0x18] sm:$0xff]
    %v244 = vld [vmem:[#allocation10 + $0x20] sm:$0xff]
    %v245 = vld [vmem:[#allocation10 + $0x28] sm:$0xff]
    %v246 = vld [vmem:[#allocation10 + $0x30] sm:$0xff]
    %v247 = vld [vmem:[#allocation10 + $0x38] sm:$0xff]
    %v248 = vld [vmem:[#allocation10 + $0x40] sm:$0xff]
    %v249 = vld [vmem:[#allocation10 + $0x48] sm:$0xff]
    %v250 = vld [vmem:[#allocation10 + $0x50] sm:$0xff]
    %v251 = vld [vmem:[#allocation10 + $0x58] sm:$0xff]
    %v252 = vld [vmem:[#allocation10 + $0x60] sm:$0xff]
    %v253 = vld [vmem:[#allocation10 + $0x68] sm:$0xff]
    %v254 = vld [vmem:[#allocation10 + $0x70] sm:$0xff]
    %v255 = vld [vmem:[#allocation10 + $0x78] sm:$0xff]
    %v256 = vld [vmem:[#allocation10 + $0x80] sm:$0xff]
    %v257 = vld [vmem:[#allocation10 + $0x88] sm:$0xff]
    %v258 = vld [vmem:[#allocation10 + $0x90] sm:$0xff]
    %v259 = vld [vmem:[#allocation10 + $0x98] sm:$0xff]
    %v260 = vld [vmem:[#allocation10 + $0xa0] sm:$0xff]
    %v261 = vld [vmem:[#allocation10 + $0xa8] sm:$0xff]
    %v262 = vld [vmem:[#allocation10 + $0xb0] sm:$0xff]
    %v263 = vld [vmem:[#allocation10 + $0xb8] sm:$0xff]
    %v264 = vld [vmem:[#allocation10 + $0xc0] sm:$0xff]
    %v265 = vld [vmem:[#allocation10 + $0xc8] sm:$0xff]
    %v266 = vld [vmem:[#allocation10 + $0xd0] sm:$0xff]
    %v267 = vld [vmem:[#allocation10 + $0xd8] sm:$0xff]
    %v268 = vld [vmem:[#allocation10 + $0xe0] sm:$0xff]
    %v269 = vld [vmem:[#allocation10 + $0xe8] sm:$0xff]
    %v270 = vld [vmem:[#allocation10 + $0xf0] sm:$0xff]
    %v271 = vld [vmem:[#allocation10 + $0xf8] sm:$0xff]
    %v272 = vld [vmem:[%s4] sm:$0x3]
    %v274 = vlaneseq
    %v275 = vshrl.u32 %v274, 7
    %v276 = vsub.s32 0, %v275
    %v277 = vrot.slane %v272, %v276
    %v278 = vlaneseq
    %v279 = vshrl.u32 %v278, 7
    %v280 = vsub.s32 1, %v279
    %v281 = vrot.slane %v272, %v280
    %284 = vmatprep.subr.mxu0 %v271
    %285 = vmatpush1.msra.mxu0 %v270
    %286 = vmatprep.subr.mxu0 %v269
    %287 = vmatpush1.msra.mxu0 %v268
    %288 = vmatprep.subr.mxu0 %v267
    %289 = vmatpush1.msra.mxu0 %v266
    %290 = vmatprep.subr.mxu0 %v265
    %291 = vmatpush1.msra.mxu0 %v264
    %292 = vmatprep.subr.mxu0 %v263
    %293 = vmatpush1.msra.mxu0 %v262
    %294 = vmatprep.subr.mxu0 %v261
    %295 = vmatpush1.msra.mxu0 %v260
    %296 = vmatprep.subr.mxu0 %v259
    %297 = vmatpush1.msra.mxu0 %v258
    %298 = vmatprep.subr.mxu0 %v257
    %299 = vmatpush1.msra.mxu0 %v256
    %300 = vmatprep.subr.mxu0 %v255
    %301 = vmatpush1.msra.mxu0 %v254
    %302 = vmatprep.subr.mxu0 %v253
    %303 = vmatpush1.msra.mxu0 %v252
    %304 = vmatprep.subr.mxu0 %v251
    %305 = vmatpush1.msra.mxu0 %v250
    %306 = vmatprep.subr.mxu0 %v249
    %307 = vmatpush1.msra.mxu0 %v248
    %308 = vmatprep.subr.mxu0 %v247
    %309 = vmatpush1.msra.mxu0 %v246
    %310 = vmatprep.subr.mxu0 %v245
    %311 = vmatpush1.msra.mxu0 %v244
    %312 = vmatprep.subr.mxu0 %v243
    %313 = vmatpush1.msra.mxu0 %v242
    %314 = vmatprep.subr.mxu0 %v241
    %315 = vmatpush1.msra.mxu0 %v240
    %316 = vmatprep.subr.mxu0 0.0
    %317 = vmatpush2.msra.mxu0 0.0
    %318 = vmatprep.subr.mxu0 0.0
    %319 = vmatpush2.msra.mxu0 0.0
    %320 = vmatprep.subr.mxu0 0.0
    %321 = vmatpush2.msra.mxu0 0.0
    %322 = vmatprep.subr.mxu0 0.0
    %323 = vmatpush2.msra.mxu0 0.0
    %324 = vmatprep.subr.mxu0 0.0
    %325 = vmatpush2.msra.mxu0 0.0
    %326 = vmatprep.subr.mxu0 0.0
    %327 = vmatpush2.msra.mxu0 0.0
    %328 = vmatprep.subr.mxu0 0.0
    %329 = vmatpush2.msra.mxu0 0.0
    %330 = vmatprep.subr.mxu0 0.0
    %331 = vmatpush2.msra.mxu0 0.0
    %332 = vmatprep.subr.mxu0 0.0
    %333 = vmatpush2.msra.mxu0 0.0
    %334 = vmatprep.subr.mxu0 0.0
    %335 = vmatpush2.msra.mxu0 0.0
    %336 = vmatprep.subr.mxu0 0.0
    %337 = vmatpush2.msra.mxu0 0.0
    %338 = vmatprep.subr.mxu0 0.0
    %339 = vmatpush2.msra.mxu0 0.0
    %340 = vmatprep.subr.mxu0 0.0
    %341 = vmatpush2.msra.mxu0 0.0
    %342 = vmatprep.subr.mxu0 0.0
    %343 = vmatpush2.msra.mxu0 0.0
    %344 = vmatprep.subr.mxu0 0.0
    %345 = vmatpush2.msra.mxu0 0.0
    %346 = vmatprep.subr.mxu0 0.0
    %347 = vmatpush2.msra.mxu0 0.0
    %348 = vmatprep.mubr.f32.mxu0 0.0
    %349 = vmatmul.mubr.f32.gmra.mxu0 %v232
    %v350 = vpop.f32.mrf.mxu0
    %v351 = vadd.f32 %v277, %v350
    %v352 = vpop.f32.mrf.mxu0
    %v353 = vadd.f32 %v281, %v352
    %354 = vmatprep.mubr.f32.mxu0 0.0
    %355 = vmatmul.mubr.f32.gmra.mxu0 %v237
    %v356 = vpop.f32.mrf.mxu0
    %v357 = vadd.f32 %v277, %v356
    %v358 = vpop.f32.mrf.mxu0
    %v359 = vadd.f32 %v281, %v358
    %360 = vdwg.mxu0
    %v361 = vxor.u32 %v351, 2147483648
    %v362 = vxor.u32 %v357, 2147483648
    %v363 = vmul.f32 %v361, 1.442695
    %v364 = vpow.pop %v363
    %v365 = vmul.f32 %v362, 1.442695
    %v366 = vpow.pop %v365
    %v367 = vadd.f32 %v364, 1.0
    %v368 = vadd.f32 %v366, 1.0
    %v369 = vrcp.pop %v367
    %v370 = vmul.f32 1.0, %v369
    %v371 = vrcp.pop %v368
    %v372 = vmul.f32 1.0, %v371
    %v373 = vmax.f32 %v353, 0.0
    %v374 = vmax.f32 %v359, 0.0
    %v375 = vmul.f32 %v370, %v373
    %v376 = vmul.f32 %v372, %v374
    %v377 = vsub.f32 1.0, %v370
    %v378 = vsub.f32 1.0, %v372
    %v379 = vmul.f32 %v377, %v232
    %v380 = vmul.f32 %v378, %v237
    %v381 = vadd.f32 %v375, %v379
    %v382 = vadd.f32 %v376, %v380
    %v383 = vld [vmem:[#allocation11] sm:$0xff]
    %v384 = vld [vmem:[#allocation11 + $0x8] sm:$0xff]
    %v385 = vld [vmem:[#allocation11 + $0x10] sm:$0xff]
    %v386 = vld [vmem:[#allocation11 + $0x18] sm:$0xff]
    %v387 = vld [vmem:[#allocation11 + $0x20] sm:$0xff]
    %v388 = vld [vmem:[#allocation11 + $0x28] sm:$0xff]
    %v389 = vld [vmem:[#allocation11 + $0x30] sm:$0xff]
    %v390 = vld [vmem:[#allocation11 + $0x38] sm:$0xff]
    %v391 = vld [vmem:[#allocation11 + $0x40] sm:$0xff]
    %v392 = vld [vmem:[#allocation11 + $0x48] sm:$0xff]
    %v393 = vld [vmem:[#allocation11 + $0x50] sm:$0xff]
    %v394 = vld [vmem:[#allocation11 + $0x58] sm:$0xff]
    %v395 = vld [vmem:[#allocation11 + $0x60] sm:$0xff]
    %v396 = vld [vmem:[#allocation11 + $0x68] sm:$0xff]
    %v397 = vld [vmem:[#allocation11 + $0x70] sm:$0xff]
    %v398 = vld [vmem:[#allocation11 + $0x78] sm:$0xff]
    %v399 = vld [vmem:[#allocation11 + $0x80] sm:$0xff]
    %v400 = vld [vmem:[#allocation11 + $0x88] sm:$0xff]
    %v401 = vld [vmem:[#allocation11 + $0x90] sm:$0xff]
    %v402 = vld [vmem:[#allocation11 + $0x98] sm:$0xff]
    %v403 = vld [vmem:[#allocation11 + $0xa0] sm:$0xff]
    %v404 = vld [vmem:[#allocation11 + $0xa8] sm:$0xff]
    %v405 = vld [vmem:[#allocation11 + $0xb0] sm:$0xff]
    %v406 = vld [vmem:[#allocation11 + $0xb8] sm:$0xff]
    %v407 = vld [vmem:[#allocation11 + $0xc0] sm:$0xff]
    %v408 = vld [vmem:[#allocation11 + $0xc8] sm:$0xff]
    %v409 = vld [vmem:[#allocation11 + $0xd0] sm:$0xff]
    %v410 = vld [vmem:[#allocation11 + $0xd8] sm:$0xff]
    %v411 = vld [vmem:[#allocation11 + $0xe0] sm:$0xff]
    %v412 = vld [vmem:[#allocation11 + $0xe8] sm:$0xff]
    %v413 = vld [vmem:[#allocation11 + $0xf0] sm:$0xff]
    %v414 = vld [vmem:[#allocation11 + $0xf8] sm:$0xff]
    %v415 = vld [vmem:[%s6] sm:$0x3]
    %v417 = vlaneseq
    %v418 = vshrl.u32 %v417, 7
    %v419 = vsub.s32 0, %v418
    %v420 = vrot.slane %v415, %v419
    %v421 = vlaneseq
    %v422 = vshrl.u32 %v421, 7
    %v423 = vsub.s32 1, %v422
    %v424 = vrot.slane %v415, %v423
    %427 = vmatprep.subr.mxu0 %v414
    %428 = vmatpush1.msra.mxu0 %v413
    %429 = vmatprep.subr.mxu0 %v412
    %430 = vmatpush1.msra.mxu0 %v411
    %431 = vmatprep.subr.mxu0 %v410
    %432 = vmatpush1.msra.mxu0 %v409
    %433 = vmatprep.subr.mxu0 %v408
    %434 = vmatpush1.msra.mxu0 %v407
    %435 = vmatprep.subr.mxu0 %v406
    %436 = vmatpush1.msra.mxu0 %v405
    %437 = vmatprep.subr.mxu0 %v404
    %438 = vmatpush1.msra.mxu0 %v403
    %439 = vmatprep.subr.mxu0 %v402
    %440 = vmatpush1.msra.mxu0 %v401
    %441 = vmatprep.subr.mxu0 %v400
    %442 = vmatpush1.msra.mxu0 %v399
    %443 = vmatprep.subr.mxu0 %v398
    %444 = vmatpush1.msra.mxu0 %v397
    %445 = vmatprep.subr.mxu0 %v396
    %446 = vmatpush1.msra.mxu0 %v395
    %447 = vmatprep.subr.mxu0 %v394
    %448 = vmatpush1.msra.mxu0 %v393
    %449 = vmatprep.subr.mxu0 %v392
    %450 = vmatpush1.msra.mxu0 %v391
    %451 = vmatprep.subr.mxu0 %v390
    %452 = vmatpush1.msra.mxu0 %v389
    %453 = vmatprep.subr.mxu0 %v388
    %454 = vmatpush1.msra.mxu0 %v387
    %455 = vmatprep.subr.mxu0 %v386
    %456 = vmatpush1.msra.mxu0 %v385
    %457 = vmatprep.subr.mxu0 %v384
    %458 = vmatpush1.msra.mxu0 %v383
    %459 = vmatprep.subr.mxu0 0.0
    %460 = vmatpush2.msra.mxu0 0.0
    %461 = vmatprep.subr.mxu0 0.0
    %462 = vmatpush2.msra.mxu0 0.0
    %463 = vmatprep.subr.mxu0 0.0
    %464 = vmatpush2.msra.mxu0 0.0
    %465 = vmatprep.subr.mxu0 0.0
    %466 = vmatpush2.msra.mxu0 0.0
    %467 = vmatprep.subr.mxu0 0.0
    %468 = vmatpush2.msra.mxu0 0.0
    %469 = vmatprep.subr.mxu0 0.0
    %470 = vmatpush2.msra.mxu0 0.0
    %471 = vmatprep.subr.mxu0 0.0
    %472 = vmatpush2.msra.mxu0 0.0
    %473 = vmatprep.subr.mxu0 0.0
    %474 = vmatpush2.msra.mxu0 0.0
    %475 = vmatprep.subr.mxu0 0.0
    %476 = vmatpush2.msra.mxu0 0.0
    %477 = vmatprep.subr.mxu0 0.0
    %478 = vmatpush2.msra.mxu0 0.0
    %479 = vmatprep.subr.mxu0 0.0
    %480 = vmatpush2.msra.mxu0 0.0
    %481 = vmatprep.subr.mxu0 0.0
    %482 = vmatpush2.msra.mxu0 0.0
    %483 = vmatprep.subr.mxu0 0.0
    %484 = vmatpush2.msra.mxu0 0.0
    %485 = vmatprep.subr.mxu0 0.0
    %486 = vmatpush2.msra.mxu0 0.0
    %487 = vmatprep.subr.mxu0 0.0
    %488 = vmatpush2.msra.mxu0 0.0
    %489 = vmatprep.subr.mxu0 0.0
    %490 = vmatpush2.msra.mxu0 0.0
    %491 = vmatprep.mubr.f32.mxu0 0.0
    %492 = vmatmul.mubr.f32.gmra.mxu0 %v381
    %v493 = vpop.f32.mrf.mxu0
    %v494 = vadd.f32 %v420, %v493
    %v495 = vpop.f32.mrf.mxu0
    %v496 = vadd.f32 %v424, %v495
    %497 = vmatprep.mubr.f32.mxu0 0.0
    %498 = vmatmul.mubr.f32.gmra.mxu0 %v382
    %v499 = vpop.f32.mrf.mxu0
    %v500 = vadd.f32 %v420, %v499
    %v501 = vpop.f32.mrf.mxu0
    %v502 = vadd.f32 %v424, %v501
    %503 = vdwg.mxu0
    %v504 = vxor.u32 %v494, 2147483648
    %v505 = vxor.u32 %v500, 2147483648
    %v506 = vmul.f32 %v504, 1.442695
    %v507 = vpow.pop %v506
    %v508 = vmul.f32 %v505, 1.442695
    %v509 = vpow.pop %v508
    %v510 = vadd.f32 %v507, 1.0
    %v511 = vadd.f32 %v509, 1.0
    %v512 = vrcp.pop %v510
    %v513 = vmul.f32 1.0, %v512
    %v514 = vrcp.pop %v511
    %v515 = vmul.f32 1.0, %v514
    %v516 = vmax.f32 %v496, 0.0
    %v517 = vmax.f32 %v502, 0.0
    %v518 = vmul.f32 %v513, %v516
    %v519 = vmul.f32 %v515, %v517
    %v520 = vsub.f32 1.0, %v513
    %v521 = vsub.f32 1.0, %v515
    %v522 = vmul.f32 %v520, %v381
    %v523 = vmul.f32 %v521, %v382
    %v524 = vadd.f32 %v518, %v522
    %v525 = vadd.f32 %v519, %v523
    %526 = vst [vmem:[#allocation13] sm:$0xff] %v524
    %527 = vst [vmem:[#allocation13 + $0x8] sm:$0xff] %v525
    // Predicated region
    $region49: #{tpu_custom_call.1} parent=1 // pred_check
      _
    $region50: #{tpu_custom_call.1} parent=1 // pred_check_branch
      %529 = sbr.rel (0) target = $region52
    $region51: #{tpu_custom_call.1} parent=1 // pred_region
      %s531 = ssub.s32 256, 256
      %532 = vsyncadd [#allocation7], %s531
      %s533 = sshll.u32 [#allocation13], 4
      %s534 = int_to_ptr.vmem [resolvable:$true] %s533
      %539 = dma.vmem_to_hbm [thread:$0]  %s534, 256, %s7, [#allocation7], 128, 128, 8
    $region52: #{tpu_custom_call.1} parent=1 // pred_fallthru
      _
    // Predicated region
    $region53: #{tpu_custom_call.1} parent=1 // pred_check
      _
    $region54: #{tpu_custom_call.1} parent=1 // pred_check_branch
      %541 = sbr.rel (0) target = $region56
    $region55: #{tpu_custom_call.1} parent=1 // pred_region
      %542 = dma.done [#allocation7], 256
    $region56: #{tpu_custom_call.1} parent=1 // pred_fallthru
      _
    %543 = vsyncpa [#allocation6], 1
    %544 = vsyncpa [#allocation9], 1
    %545 = vsyncpa [#allocation12], 1
    %546 = vsyncpa [#allocation7], 1

</llo_original>
